<compile_context>
chip_gen: v5e
topology: v5e:2x2
jax: 0.10.0
libtpu: 0.0.40
codegen_flags: <defaults>
</compile_context>

<pallas_src>
import functools
import math

import jax
import jax.numpy as jnp
from jax.experimental import pallas as pl
from jax.experimental.pallas import tpu as pltpu

_LANES = 128
_SUBLANES = 8


def _cdiv(a, b):
    return -(-a // b)


def _round_up(a, b):
    return _cdiv(a, b) * b


def _loss_kernel(ml_ref, pm_ref, gt_ref, sp_ref, se_ref, out_ref,
                 acc_ref, bce_ref, *, inv_mel, inv_stop, n_stop):
    i = pl.program_id(0)          # partial / core index  ("parallel")
    j = pl.program_id(1)          # tile index within partial ("arbitrary")
    last_j = pl.num_programs(1) - 1

    # --- init per-partial accumulators ---
    @pl.when(j == 0)
    def _():
        acc_ref[...] = jnp.zeros_like(acc_ref)
        bce_ref[0] = 0.0

    # --- BCEWithLogits over the (small, resident) stop-token block: once ---
    @pl.when(jnp.logical_and(i == 0, j == 0))
    def _():
        x = sp_ref[...].astype(jnp.float32)
        z = se_ref[...].astype(jnp.float32)
        bce = jnp.maximum(x, 0.0) - x * z + jnp.log1p(jnp.exp(-jnp.abs(x)))
        rows, lanes = sp_ref.shape
        flat_idx = (jax.lax.broadcasted_iota(jnp.int32, (rows, lanes), 0) * lanes
                    + jax.lax.broadcasted_iota(jnp.int32, (rows, lanes), 1))
        bce = jnp.where(flat_idx < n_stop, bce, 0.0)   # mask padded elements
        bce_ref[0] = jnp.sum(bce)

    # --- steady state: pure elementwise VPU work into a VMEM accumulator ---
    gt = gt_ref[...].astype(jnp.float32)
    d1 = pm_ref[...].astype(jnp.float32) - gt
    d2 = ml_ref[...].astype(jnp.float32) - gt
    acc_ref[...] += d1 * d1 + d2 * d2

    # --- epilogue: single cross-lane reduce + mean scaling per partial ---
    @pl.when(j == last_j)
    def _():
        mel_part = jnp.sum(acc_ref[...]) * inv_mel
        stop_part = jnp.where(i == 0, bce_ref[0] * inv_stop, 0.0)
        total = mel_part + stop_part
        r = jax.lax.broadcasted_iota(jnp.int32, out_ref.shape, 0)
        c = jax.lax.broadcasted_iota(jnp.int32, out_ref.shape, 1)
        out_ref[...] = jnp.where(jnp.logical_and(r == 0, c == 0), total, 0.0)


def transformer_tts_loss(mel_linear, predicted_mel, ground_truth_mel,
                         stop_token_pred, stop_token_expected,
                         *, row_block=1024, num_partials=2):
    assert mel_linear.shape == predicted_mel.shape == ground_truth_mel.shape
    n_mel = int(math.prod(ground_truth_mel.shape))
    n_stop = int(math.prod(stop_token_pred.shape))

    # --- lane-dense mel layout: flatten, zero-pad, (rows, 128) ---
    rows_needed = _cdiv(n_mel, _LANES)
    row_block = max(_SUBLANES,
                    min(int(row_block), _round_up(rows_needed, _SUBLANES)))
    rows = _round_up(rows_needed, row_block * num_partials)
    mel_pad = rows * _LANES - n_mel

    def mel_rows(x):
        x = x.reshape(-1)
        if mel_pad:
            x = jnp.pad(x, (0, mel_pad))   # zeros: 0 contribution to SSE
        return x.reshape(rows, _LANES)

    ml = mel_rows(mel_linear)
    pm = mel_rows(predicted_mel)
    gt = mel_rows(ground_truth_mel)

    # --- lane-dense stop-token layout: one small resident block ---
    stop_rows = _round_up(max(_cdiv(n_stop, _LANES), 1), _SUBLANES)
    stop_pad = stop_rows * _LANES - n_stop

    def stop_rows_arr(x):
        x = x.reshape(-1)
        if stop_pad:
            x = jnp.pad(x, (0, stop_pad))
        return x.reshape(stop_rows, _LANES)

    sp = stop_rows_arr(stop_token_pred)
    se = stop_rows_arr(stop_token_expected)

    tiles = rows // row_block
    tiles_per_partial = tiles // num_partials

    inv_mel = 1.0 / float(n_mel)     # MSE mean denominator (true count)
    inv_stop = 1.0 / float(n_stop)   # BCE mean denominator (true count)

    kernel = functools.partial(_loss_kernel, inv_mel=inv_mel,
                               inv_stop=inv_stop, n_stop=n_stop)

    mel_spec = pl.BlockSpec(
        (row_block, _LANES),
        lambda i, j, _tpp=tiles_per_partial: (i * _tpp + j, 0))
    stop_spec = pl.BlockSpec((stop_rows, _LANES), lambda i, j: (0, 0))

    out = pl.pallas_call(
        kernel,
        out_shape=jax.ShapeDtypeStruct((num_partials * _SUBLANES, _LANES),
                                       jnp.float32),
        grid_spec=pltpu.PrefetchScalarGridSpec(
            num_scalar_prefetch=0,
            grid=(num_partials, tiles_per_partial),
            in_specs=[mel_spec, mel_spec, mel_spec, stop_spec, stop_spec],
            out_specs=pl.BlockSpec((_SUBLANES, _LANES), lambda i, j: (i, 0)),
            scratch_shapes=[pltpu.VMEM((row_block, _LANES), jnp.float32),
                            pltpu.SMEM((1,), jnp.float32)],
        ),
        compiler_params=pltpu.CompilerParams(
            dimension_semantics=("parallel", "arbitrary")),
    )(ml, pm, gt, sp, se)

    # Combine per-partial scalars (each partial wrote its value at [0, 0] of
    # its own (8, 128) output block; everything else is zero).
    return jnp.sum(out)


def _reference_loss(mel_linear, predicted_mel, ground_truth_mel,
                    stop_token_pred, stop_token_expected):
    mse1 = jnp.mean((predicted_mel - ground_truth_mel) ** 2)
    mse2 = jnp.mean((mel_linear - ground_truth_mel) ** 2)
    x = stop_token_pred.reshape(-1, 1)
    z = stop_token_expected.reshape(-1, 1)
    bce = jnp.mean(jnp.maximum(x, 0.0) - x * z + jnp.log1p(jnp.exp(-jnp.abs(x))))
    return mse1 + mse2 + bce


if __name__ == "__main__":
    key = jax.random.PRNGKey(0)

    # (batch, decoder steps, n_mels) -- second case is deliberately not a
    # multiple of 128 anywhere to exercise the pad/mask paths.
    for (B, T, M) in [(2, 8, 32), (3, 17, 80)]:
        k1, k2, k3, k4, k5, key = jax.random.split(key, 6)
        mel_linear = jax.random.normal(k1, (B, T, M), dtype=jnp.float32)
        predicted_mel = jax.random.normal(k2, (B, T, M), dtype=jnp.float32)
        ground_truth_mel = jax.random.normal(k3, (B, T, M), dtype=jnp.float32)
        stop_token_pred = jax.random.normal(k4, (B, T), dtype=jnp.float32)
        stop_token_expected = (
            jax.random.uniform(k5, (B, T)) > 0.5).astype(jnp.float32)

        loss = transformer_tts_loss(mel_linear, predicted_mel,
                                    ground_truth_mel, stop_token_pred,
                                    stop_token_expected)
        loss = jax.block_until_ready(loss)

        ref = _reference_loss(mel_linear, predicted_mel, ground_truth_mel,
                              stop_token_pred, stop_token_expected)
        assert jnp.allclose(loss, ref, rtol=1e-5, atol=1e-5), (B, T, M, loss, ref)

    print("KERNEL_OK")
</pallas_src>

<mosaic_0001>
module attributes {stable_mosaic.version = 11 : i64} {
  func.func @_loss_kernel(%arg0: i32, %arg1: i32, %arg2: memref<8x128xf32, #tpu.memory_space<vmem>>, %arg3: memref<8x128xf32, #tpu.memory_space<vmem>>, %arg4: memref<8x128xf32, #tpu.memory_space<vmem>>, %arg5: memref<8x128xf32, #tpu.memory_space<vmem>>, %arg6: memref<8x128xf32, #tpu.memory_space<vmem>>, %arg7: memref<8x128xf32, #tpu.memory_space<vmem>>, %arg8: memref<8x128xf32, #tpu.memory_space<vmem>>, %arg9: memref<1xf32, #tpu.memory_space<smem>>) attributes {dimension_semantics = [#tpu.dimension_semantics<parallel>, #tpu.dimension_semantics<arbitrary>], iteration_bounds = array<i64: 2, 1>, scalar_prefetch = 0 : i64, scratch_operands = 2 : i64, tpu.core_type = #tpu.core_type<tc>, window_params = [{transform_indices = @transform_0, window_bounds = array<i64: 8, 128>}, {transform_indices = @transform_1, window_bounds = array<i64: 8, 128>}, {transform_indices = @transform_2, window_bounds = array<i64: 8, 128>}, {pipeline_mode = #tpu.pipeline_mode<synchronous>, transform_indices = @transform_3, window_bounds = array<i64: 8, 128>}, {pipeline_mode = #tpu.pipeline_mode<synchronous>, transform_indices = @transform_4, window_bounds = array<i64: 8, 128>}, {transform_indices = @transform_5, window_bounds = array<i64: 8, 128>}]} {
    %c0_i32 = arith.constant 0 : i32
    %0 = arith.cmpi eq, %arg1, %c0_i32 : i32
    %1 = arith.extui %0 : i1 to i32
    %c0_i32_0 = arith.constant 0 : i32
    %2 = arith.cmpi ne, %1, %c0_i32_0 : i32
    scf.if %2 {
      %cst = arith.constant 0.000000e+00 : f32
      %22 = vector.broadcast %cst : f32 to vector<8x128xf32>
      %c0_15 = arith.constant 0 : index
      %c0_16 = arith.constant 0 : index
      %23 = vector.load %arg8[%c0_15, %c0_16] : memref<8x128xf32, #tpu.memory_space<vmem>>, vector<8x128xf32>
      tpu.vector_store %arg8[%c0_15, %c0_16], %22 {strides = array<i32>} : memref<8x128xf32, #tpu.memory_space<vmem>>, vector<8x128xf32>,
      %cst_17 = arith.constant 0.000000e+00 : f32
      %c0_18 = arith.constant 0 : index
      %24 = memref.load %arg9[%c0_18] : memref<1xf32, #tpu.memory_space<smem>>
      memref.store %cst_17, %arg9[%c0_18] : memref<1xf32, #tpu.memory_space<smem>>
    } else {
    }
    %c0_i32_1 = arith.constant 0 : i32
    %3 = arith.cmpi eq, %arg0, %c0_i32_1 : i32
    %c0_i32_2 = arith.constant 0 : i32
    %4 = arith.cmpi eq, %arg1, %c0_i32_2 : i32
    %5 = arith.andi %3, %4 : i1
    %6 = arith.extui %5 : i1 to i32
    %c0_i32_3 = arith.constant 0 : i32
    %7 = arith.cmpi ne, %6, %c0_i32_3 : i32
    scf.if %7 {
      %c0_15 = arith.constant 0 : index
      %c0_16 = arith.constant 0 : index
      %22 = vector.load %arg5[%c0_15, %c0_16] : memref<8x128xf32, #tpu.memory_space<vmem>>, vector<8x128xf32>
      %c0_17 = arith.constant 0 : index
      %c0_18 = arith.constant 0 : index
      %23 = vector.load %arg6[%c0_17, %c0_18] : memref<8x128xf32, #tpu.memory_space<vmem>>, vector<8x128xf32>
      %cst = arith.constant 0.000000e+00 : f32
      %24 = vector.broadcast %cst : f32 to vector<8x128xf32>
      %25 = arith.maximumf %22, %24 : vector<8x128xf32>
      %26 = arith.mulf %22, %23 : vector<8x128xf32>
      %27 = arith.subf %25, %26 : vector<8x128xf32>
      %28 = math.absf %22 : vector<8x128xf32>
      %cst_19 = arith.constant 0.000000e+00 : f32
      %29 = vector.broadcast %cst_19 : f32 to vector<8x128xf32>
      %30 = arith.subf %29, %28 : vector<8x128xf32>
      %31 = math.exp %30 : vector<8x128xf32>
      %32 = math.log1p %31 : vector<8x128xf32>
      %33 = arith.addf %27, %32 : vector<8x128xf32>
      %34 = tpu.iota {dimensions = array<i32: 0>} : vector<8x128xi32>
      %c128_i32 = arith.constant 128 : i32
      %35 = vector.broadcast %c128_i32 : i32 to vector<8x128xi32>
      %36 = arith.muli %34, %35 : vector<8x128xi32>
      %37 = tpu.iota {dimensions = array<i32: 1>} : vector<8x128xi32>
      %38 = arith.addi %36, %37 : vector<8x128xi32>
      %c16_i32 = arith.constant 16 : i32
      %39 = vector.broadcast %c16_i32 : i32 to vector<8x128xi32>
      %40 = arith.cmpi slt, %38, %39 : vector<8x128xi32>
      %cst_20 = arith.constant 0.000000e+00 : f32
      %41 = vector.broadcast %cst_20 : f32 to vector<8x128xf32>
      %42 = arith.select %40, %33, %41 : vector<8x128xi1>, vector<8x128xf32>
      %43 = vector.shape_cast %42 : vector<8x128xf32> to vector<1x8x128xf32>
      %cst_21 = arith.constant dense<0.000000e+00> : vector<1xf32>
      %44 = vector.multi_reduction <add>, %43, %cst_21 [1, 2] : vector<1x8x128xf32> to vector<1xf32>
      %45 = vector.shape_cast %44 : vector<1xf32> to vector<1x1x1xf32>
      %46 = vector.extract %45[0, 0, 0] : f32 from vector<1x1x1xf32>
      %c0_22 = arith.constant 0 : index
      %47 = memref.load %arg9[%c0_22] : memref<1xf32, #tpu.memory_space<smem>>
      memref.store %46, %arg9[%c0_22] : memref<1xf32, #tpu.memory_space<smem>>
    } else {
    }
    %c0 = arith.constant 0 : index
    %c0_4 = arith.constant 0 : index
    %8 = vector.load %arg4[%c0, %c0_4] : memref<8x128xf32, #tpu.memory_space<vmem>>, vector<8x128xf32>
    %c0_5 = arith.constant 0 : index
    %c0_6 = arith.constant 0 : index
    %9 = vector.load %arg3[%c0_5, %c0_6] : memref<8x128xf32, #tpu.memory_space<vmem>>, vector<8x128xf32>
    %10 = arith.subf %9, %8 : vector<8x128xf32>
    %c0_7 = arith.constant 0 : index
    %c0_8 = arith.constant 0 : index
    %11 = vector.load %arg2[%c0_7, %c0_8] : memref<8x128xf32, #tpu.memory_space<vmem>>, vector<8x128xf32>
    %12 = arith.subf %11, %8 : vector<8x128xf32>
    %c0_9 = arith.constant 0 : index
    %c0_10 = arith.constant 0 : index
    %13 = vector.load %arg8[%c0_9, %c0_10] : memref<8x128xf32, #tpu.memory_space<vmem>>, vector<8x128xf32>
    %14 = arith.mulf %10, %10 : vector<8x128xf32>
    %15 = arith.mulf %12, %12 : vector<8x128xf32>
    %16 = arith.addf %14, %15 : vector<8x128xf32>
    %17 = arith.addf %13, %16 : vector<8x128xf32>
    %c0_11 = arith.constant 0 : index
    %c0_12 = arith.constant 0 : index
    %18 = vector.load %arg8[%c0_11, %c0_12] : memref<8x128xf32, #tpu.memory_space<vmem>>, vector<8x128xf32>
    tpu.vector_store %arg8[%c0_11, %c0_12], %17 {strides = array<i32>} : memref<8x128xf32, #tpu.memory_space<vmem>>, vector<8x128xf32>,
    %c0_i32_13 = arith.constant 0 : i32
    %19 = arith.cmpi eq, %arg1, %c0_i32_13 : i32
    %20 = arith.extui %19 : i1 to i32
    %c0_i32_14 = arith.constant 0 : i32
    %21 = arith.cmpi ne, %20, %c0_i32_14 : i32
    scf.if %21 {
      %c0_15 = arith.constant 0 : index
      %c0_16 = arith.constant 0 : index
      %22 = vector.load %arg8[%c0_15, %c0_16] : memref<8x128xf32, #tpu.memory_space<vmem>>, vector<8x128xf32>
      %23 = vector.shape_cast %22 : vector<8x128xf32> to vector<1x8x128xf32>
      %cst = arith.constant dense<0.000000e+00> : vector<1xf32>
      %24 = vector.multi_reduction <add>, %23, %cst [1, 2] : vector<1x8x128xf32> to vector<1xf32>
      %25 = vector.shape_cast %24 : vector<1xf32> to vector<1x1x1xf32>
      %26 = vector.extract %25[0, 0, 0] : f32 from vector<1x1x1xf32>
      %cst_17 = arith.constant 0.001953125 : f32
      %27 = arith.mulf %26, %cst_17 : f32
      %c0_i32_18 = arith.constant 0 : i32
      %28 = arith.cmpi eq, %arg0, %c0_i32_18 : i32
      %c0_19 = arith.constant 0 : index
      %29 = memref.load %arg9[%c0_19] : memref<1xf32, #tpu.memory_space<smem>>
      %cst_20 = arith.constant 6.250000e-02 : f32
      %30 = arith.mulf %29, %cst_20 : f32
      %cst_21 = arith.constant 0.000000e+00 : f32
      %31 = arith.select %28, %30, %cst_21 : f32
      %32 = arith.addf %27, %31 : f32
      %33 = tpu.iota {dimensions = array<i32: 0>} : vector<8x128xi32>
      %34 = tpu.iota {dimensions = array<i32: 1>} : vector<8x128xi32>
      %c0_i32_22 = arith.constant 0 : i32
      %35 = vector.broadcast %c0_i32_22 : i32 to vector<8x128xi32>
      %36 = arith.cmpi eq, %33, %35 : vector<8x128xi32>
      %c0_i32_23 = arith.constant 0 : i32
      %37 = vector.broadcast %c0_i32_23 : i32 to vector<8x128xi32>
      %38 = arith.cmpi eq, %34, %37 : vector<8x128xi32>
      %39 = arith.andi %36, %38 : vector<8x128xi1>
      %cst_24 = arith.constant 0.000000e+00 : f32
      %40 = vector.broadcast %32 : f32 to vector<8x128xf32>
      %41 = vector.broadcast %cst_24 : f32 to vector<8x128xf32>
      %42 = arith.select %39, %40, %41 : vector<8x128xi1>, vector<8x128xf32>
      %c0_25 = arith.constant 0 : index
      %c0_26 = arith.constant 0 : index
      %43 = vector.load %arg7[%c0_25, %c0_26] : memref<8x128xf32, #tpu.memory_space<vmem>>, vector<8x128xf32>
      tpu.vector_store %arg7[%c0_25, %c0_26], %42 {strides = array<i32>} : memref<8x128xf32, #tpu.memory_space<vmem>>, vector<8x128xf32>,
    } else {
    }
    return
  }
  func.func @transform_0(%arg0: i32, %arg1: i32) -> (i32, i32) {
    %c1_i32 = arith.constant 1 : i32
    %0 = arith.muli %arg0, %c1_i32 : i32
    %1 = arith.addi %0, %arg1 : i32
    %c0_i32 = arith.constant 0 : i32
    %c0_i32_0 = arith.constant 0 : i32
    return %1, %c0_i32 : i32, i32
  }
  func.func @transform_1(%arg0: i32, %arg1: i32) -> (i32, i32) {
    %c1_i32 = arith.constant 1 : i32
    %0 = arith.muli %arg0, %c1_i32 : i32
    %1 = arith.addi %0, %arg1 : i32
    %c0_i32 = arith.constant 0 : i32
    %c0_i32_0 = arith.constant 0 : i32
    return %1, %c0_i32 : i32, i32
  }
  func.func @transform_2(%arg0: i32, %arg1: i32) -> (i32, i32) {
    %c1_i32 = arith.constant 1 : i32
    %0 = arith.muli %arg0, %c1_i32 : i32
    %1 = arith.addi %0, %arg1 : i32
    %c0_i32 = arith.constant 0 : i32
    %c0_i32_0 = arith.constant 0 : i32
    return %1, %c0_i32 : i32, i32
  }
  func.func @transform_3(%arg0: i32, %arg1: i32) -> (i32, i32) {
    %c0_i32 = arith.constant 0 : i32
    %c0_i32_0 = arith.constant 0 : i32
    %c0_i32_1 = arith.constant 0 : i32
    return %c0_i32, %c0_i32_0 : i32, i32
  }
  func.func @transform_4(%arg0: i32, %arg1: i32) -> (i32, i32) {
    %c0_i32 = arith.constant 0 : i32
    %c0_i32_0 = arith.constant 0 : i32
    %c0_i32_1 = arith.constant 0 : i32
    return %c0_i32, %c0_i32_0 : i32, i32
  }
  func.func @transform_5(%arg0: i32, %arg1: i32) -> (i32, i32) {
    %c0_i32 = arith.constant 0 : i32
    %c0_i32_0 = arith.constant 0 : i32
    return %arg0, %c0_i32 : i32, i32
  }
}

</mosaic_0001>

<llo_original>
// kernel: tpu_custom_call.1
$region0: #{tpu_custom_call.1}
  #allocation0 [shape = 'u32[]', space=smem, size = 0x4, offset = 0x4, fixed_abs, tag = 'smem constant byte address 0x4 - core index']
  #allocation1 [shape = 'u32[72,128]{1,0:T(1,128)}', space=vmem, size = 0x9000, scoped, tag = 'internal scratch']
  #allocation2 [shape = 'f32[8,128]{1,0:T(8,128)}', space=vmem, size = 0x1000, scoped, tag = 'scratch operand']
  #allocation3 [shape = 'f32[1]{0:T(128)}', space=smem, size = 0x200, scoped, tag = 'scratch operand']
  %s0 = inlined_call_operand.hbm [shape: f32[16,128], index: 0, kind: input, shape index: {}]
  %s1 = inlined_call_operand.hbm [shape: f32[16,128], index: 1, kind: input, shape index: {}]
  %s2 = inlined_call_operand.hbm [shape: f32[16,128], index: 2, kind: input, shape index: {}]
  %s3 = inlined_call_operand.hbm [shape: f32[8,128], index: 3, kind: input, shape index: {}]
  %s4 = inlined_call_operand.hbm [shape: f32[8,128], index: 4, kind: input, shape index: {}]
  %s5 = inlined_call_operand.hbm [shape: f32[16,128], index: 5, kind: output, shape index: {}]
  %s6 = sld [smem:[#allocation0]]
  $region85: #{tpu_custom_call.1} parent=0
    _
  %s8 = ssub.s32 1, %s6
  %s9 = scalar_select 0, %s8, %s6
  $region1: #{tpu_custom_call.1} parent=0
    #allocation4 [shape = 'u8[8192]{0}', space=vmem, size = 0x2000, scoped, tag = 'input window, operand 0']
    #allocation5 [shape = 's32[2]{0}', space=sflag, size = 0x8, scoped, tag = 'scoped memory for tpu_custom_call.1']
    #allocation6 [shape = 's32[2]{0}', space=sflag, size = 0x8, scoped, tag = 'scoped memory for tpu_custom_call.1']
    #allocation7 [shape = 'u8[8192]{0}', space=vmem, size = 0x2000, scoped, tag = 'input window, operand 1']
    #allocation8 [shape = 's32[2]{0}', space=sflag, size = 0x8, scoped, tag = 'scoped memory for tpu_custom_call.1']
    #allocation9 [shape = 'u8[8192]{0}', space=vmem, size = 0x2000, scoped, tag = 'input window, operand 2']
    #allocation10 [shape = 'u8[4096]{0}', space=vmem, size = 0x1000, scoped, tag = 'input window, operand 3, single buffered']
    #allocation11 [shape = 's32[1]{0}', space=sflag, size = 0x4, scoped, tag = 'scoped memory for tpu_custom_call.1']
    #allocation12 [shape = 'u8[4096]{0}', space=vmem, size = 0x1000, scoped, tag = 'input window, operand 4, single buffered']
    #allocation13 [shape = 'u8[8192]{0}', space=vmem, size = 0x2000, scoped, tag = 'output window, operand 0']
    %10 = vsyncpa [#allocation5], 0
    %s11 = scalar_lea.sflag [#allocation5], 1
    %12 = vsyncpa %s11, 0
    %13 = vsyncpa [#allocation8], 0
    %s14 = scalar_lea.sflag [#allocation8], 1
    %15 = vsyncpa %s14, 0
    %16 = vsyncpa [#allocation11], 0
    %17 = vsyncpa [#allocation6], 0
    %s18 = scalar_lea.sflag [#allocation6], 1
    %19 = vsyncpa %s18, 0
    loop: start=0, step=1, limit=4
    $region2: #{tpu_custom_call.1} parent=1 // loop_pre_header
      _
    $region3: #{tpu_custom_call.1} parent=1 // loop_header
      %s21 = sphi 0, %s25
      %p22 = scmp.ge.s32.totalorder %s21, 4
      %s28 = sphi 0, %s40
      %s29 = sphi 0, %s36
      %s30 = sphi 0, %s28
      %s31 = sphi 0, %s29
      %s32 = sphi 0, %s30
      %s33 = sphi 0, %s31
      %s45 = sphi 0, %s47
      %s48 = sphi 0, %s45
      %s49 = sphi 0, %s48
      %s65 = sphi 0, %s49
      %s73 = sphi 0, %s75
      %s76 = sphi 0, %s73
      %s77 = sphi 0, %s76
      %s93 = sphi 0, %s77
      %s101 = sphi 0, %s103
      %s104 = sphi 0, %s101
      %s105 = sphi 0, %s104
      %s121 = sphi 0, %s105
      %s125 = sphi 0, %s125
      %s127 = sphi 0, %s125
      %s128 = sphi 0, %s127
      %s142 = sphi 0, %s128
      %s146 = sphi 0, %s146
      %s148 = sphi 0, %s146
      %s149 = sphi 0, %s148
      %s163 = sphi 0, %s149
      %s169 = sphi 0, %s171
      %s172 = sphi 0, %s169
      %s173 = sphi 0, %s172
      %s189 = sphi 0, %s173
    $region4: #{tpu_custom_call.1} parent=1 // loop_header_branch
      %24 = sbr.rel (%p22) target = $region8
    $region5: #{tpu_custom_call.1} parent=1 // loop_body
      %s26 = ssub.s32 %s21, 1
      %s27 = ssub.s32 %s21, 2
      %s34 = sadd.s32 1, %s29
      %p35 = scmp.ge.s32.totalorder %s34, 1
      %s36 = scalar_select %p35, 0, %s34
      %s37 = sadd.s32 1, %s28
      %s38 = scalar_select %p35, %s37, %s28
      %p39 = scmp.ge.s32.totalorder %s38, 2
      %s40 = scalar_select %p39, 0, %s38
      %s41 = sadd.s32 %s28, %s29
      %s42 = sadd.s32 %s40, %s36
      %s43 = ssub.s32 %s41, %s42
      %p44 = scmp.eq.s32.totalorder %s43, 0
      %s46 = sadd.s32 %s45, 1
      %s47 = scalar_select %p44, %s45, %s46
      %p50 = pneg %p44
      %p51 = scmp.eq.s32.totalorder %s21, 1
      %p52 = por %p50, %p51
      %p53 = scmp.ne.s32.totalorder %s45, %s48
      %p54 = scmp.eq.s32.totalorder %s21, 0
      %p55 = por %p53, %p54
      %p56 = scmp.ne.s32.totalorder %s45, %s48
      %p57 = scmp.eq.s32.totalorder %s26, 1
      %p58 = por %p56, %p57
      %p59 = scmp.ne.s32.totalorder %s48, %s49
      %p60 = scmp.eq.s32.totalorder %s26, 0
      %p61 = por %p59, %p60
      %p62 = scmp.ne.s32.totalorder %s48, %s49
      %p63 = scmp.eq.s32.totalorder %s27, 1
      %p64 = por %p62, %p63
      %p66 = scmp.ne.s32.totalorder %s49, %s65
      %p67 = scmp.eq.s32.totalorder %s27, 0
      %p68 = por %p66, %p67
      %s69 = sadd.s32 %s28, %s29
      %s70 = sadd.s32 %s40, %s36
      %s71 = ssub.s32 %s69, %s70
      %p72 = scmp.eq.s32.totalorder %s71, 0
      %s74 = sadd.s32 %s73, 1
      %s75 = scalar_select %p72, %s73, %s74
      %p78 = pneg %p72
      %p79 = scmp.eq.s32.totalorder %s21, 1
      %p80 = por %p78, %p79
      %p81 = scmp.ne.s32.totalorder %s73, %s76
      %p82 = scmp.eq.s32.totalorder %s21, 0
      %p83 = por %p81, %p82
      %p84 = scmp.ne.s32.totalorder %s73, %s76
      %p85 = scmp.eq.s32.totalorder %s26, 1
      %p86 = por %p84, %p85
      %p87 = scmp.ne.s32.totalorder %s76, %s77
      %p88 = scmp.eq.s32.totalorder %s26, 0
      %p89 = por %p87, %p88
      %p90 = scmp.ne.s32.totalorder %s76, %s77
      %p91 = scmp.eq.s32.totalorder %s27, 1
      %p92 = por %p90, %p91
      %p94 = scmp.ne.s32.totalorder %s77, %s93
      %p95 = scmp.eq.s32.totalorder %s27, 0
      %p96 = por %p94, %p95
      %s97 = sadd.s32 %s28, %s29
      %s98 = sadd.s32 %s40, %s36
      %s99 = ssub.s32 %s97, %s98
      %p100 = scmp.eq.s32.totalorder %s99, 0
      %s102 = sadd.s32 %s101, 1
      %s103 = scalar_select %p100, %s101, %s102
      %p106 = pneg %p100
      %p107 = scmp.eq.s32.totalorder %s21, 1
      %p108 = por %p106, %p107
      %p109 = scmp.ne.s32.totalorder %s101, %s104
      %p110 = scmp.eq.s32.totalorder %s21, 0
      %p111 = por %p109, %p110
      %p112 = scmp.ne.s32.totalorder %s101, %s104
      %p113 = scmp.eq.s32.totalorder %s26, 1
      %p114 = por %p112, %p113
      %p115 = scmp.ne.s32.totalorder %s104, %s105
      %p116 = scmp.eq.s32.totalorder %s26, 0
      %p117 = por %p115, %p116
      %p118 = scmp.ne.s32.totalorder %s104, %s105
      %p119 = scmp.eq.s32.totalorder %s27, 1
      %p120 = por %p118, %p119
      %p122 = scmp.ne.s32.totalorder %s105, %s121
      %p123 = scmp.eq.s32.totalorder %s27, 0
      %p124 = por %p122, %p123
      %s126 = sadd.s32 %s125, 1
      %p129 = scmp.eq.s32.totalorder %s21, 1
      %p130 = scmp.ne.s32.totalorder %s125, %s127
      %p131 = scmp.eq.s32.totalorder %s21, 0
      %p132 = por %p130, %p131
      %p133 = scmp.ne.s32.totalorder %s125, %s127
      %p134 = scmp.eq.s32.totalorder %s26, 1
      %p135 = por %p133, %p134
      %p136 = scmp.ne.s32.totalorder %s127, %s128
      %p137 = scmp.eq.s32.totalorder %s26, 0
      %p138 = por %p136, %p137
      %p139 = scmp.ne.s32.totalorder %s127, %s128
      %p140 = scmp.eq.s32.totalorder %s27, 1
      %p141 = por %p139, %p140
      %p143 = scmp.ne.s32.totalorder %s128, %s142
      %p144 = scmp.eq.s32.totalorder %s27, 0
      %p145 = por %p143, %p144
      %s147 = sadd.s32 %s146, 1
      %p150 = scmp.eq.s32.totalorder %s21, 1
      %p151 = scmp.ne.s32.totalorder %s146, %s148
      %p152 = scmp.eq.s32.totalorder %s21, 0
      %p153 = por %p151, %p152
      %p154 = scmp.ne.s32.totalorder %s146, %s148
      %p155 = scmp.eq.s32.totalorder %s26, 1
      %p156 = por %p154, %p155
      %p157 = scmp.ne.s32.totalorder %s148, %s149
      %p158 = scmp.eq.s32.totalorder %s26, 0
      %p159 = por %p157, %p158
      %p160 = scmp.ne.s32.totalorder %s148, %s149
      %p161 = scmp.eq.s32.totalorder %s27, 1
      %p162 = por %p160, %p161
      %p164 = scmp.ne.s32.totalorder %s149, %s163
      %p165 = scmp.eq.s32.totalorder %s27, 0
      %p166 = por %p164, %p165
      %s167 = ssub.s32 %s28, %s40
      %p168 = scmp.eq.s32.totalorder %s167, 0
      %s170 = sadd.s32 %s169, 1
      %s171 = scalar_select %p168, %s169, %s170
      %p174 = pneg %p168
      %p175 = scmp.eq.s32.totalorder %s21, 1
      %p176 = por %p174, %p175
      %p177 = scmp.ne.s32.totalorder %s169, %s172
      %p178 = scmp.eq.s32.totalorder %s21, 0
      %p179 = por %p177, %p178
      %p180 = scmp.ne.s32.totalorder %s169, %s172
      %p181 = scmp.eq.s32.totalorder %s26, 1
      %p182 = por %p180, %p181
      %p183 = scmp.ne.s32.totalorder %s172, %s173
      %p184 = scmp.eq.s32.totalorder %s26, 0
      %p185 = por %p183, %p184
      %p186 = scmp.ne.s32.totalorder %s172, %s173
      %p187 = scmp.eq.s32.totalorder %s27, 1
      %p188 = por %p186, %p187
      %p190 = scmp.ne.s32.totalorder %s173, %s189
      %p191 = scmp.eq.s32.totalorder %s27, 0
      %p192 = por %p190, %p191
      %p193 = scmp.le.s32.totalorder 1, %s21
      %p194 = scmp.lt.s32.totalorder %s21, 3
      %p195 = pnand %p193, %p194
      %p196 = pneg %p195
      // Predicated region
      $region9: #{tpu_custom_call.1} parent=5 // pred_check
        _
      $region10: #{tpu_custom_call.1} parent=5 // pred_check_branch
        %198 = sbr.rel (%p195) target = $region12
      $region11: #{tpu_custom_call.1} parent=5 // pred_region
        %s199 = ssub.s32 %s21, 1
        // Predicated region
        $region13: #{tpu_custom_call.1} parent=11 // pred_check
          %p200 = pneg %p138
        $region14: #{tpu_custom_call.1} parent=11 // pred_check_branch
          %202 = sbr.rel (%p200) target = $region16
        $region15: #{tpu_custom_call.1} parent=11 // pred_region
          %204 = vsyncadd [#allocation11], 0
          %s206 = sshll.u32 %s3, 4
          %s207 = int_to_ptr.hbm [resolvable:$true] %s206
          %s208 = sshll.u32 [#allocation10], 4
          %s209 = int_to_ptr.vmem [resolvable:$true] %s208
          %211 = dma.hbm_to_vmem [thread:$0]  %s207, 128, %s209, [#allocation11]
        $region16: #{tpu_custom_call.1} parent=11 // pred_fallthru
          _
        // Predicated region
        $region17: #{tpu_custom_call.1} parent=11 // pred_check
          %p212 = pneg %p159
        $region18: #{tpu_custom_call.1} parent=11 // pred_check_branch
          %214 = sbr.rel (%p212) target = $region20
        $region19: #{tpu_custom_call.1} parent=11 // pred_region
          %216 = vsyncadd [#allocation11], 0
          %s218 = sshll.u32 %s4, 4
          %s219 = int_to_ptr.hbm [resolvable:$true] %s218
          %s220 = sshll.u32 [#allocation12], 4
          %s221 = int_to_ptr.vmem [resolvable:$true] %s220
          %223 = dma.hbm_to_vmem [thread:$0]  %s219, 128, %s221, [#allocation11]
        $region20: #{tpu_custom_call.1} parent=11 // pred_fallthru
          _
      $region12: #{tpu_custom_call.1} parent=5 // pred_fallthru
        _
      %p224 = scmp.lt.s32.totalorder %s21, 2
      // Predicated region
      $region21: #{tpu_custom_call.1} parent=5 // pred_check
        %p225 = pneg %p224
      $region22: #{tpu_custom_call.1} parent=5 // pred_check_branch
        %227 = sbr.rel (%p225) target = $region24
      $region23: #{tpu_custom_call.1} parent=5 // pred_region
        // Predicated region
        $region25: #{tpu_custom_call.1} parent=23 // pred_check
          %p228 = pneg %p55
        $region26: #{tpu_custom_call.1} parent=23 // pred_check_branch
          %230 = sbr.rel (%p228) target = $region28
        $region27: #{tpu_custom_call.1} parent=23 // pred_region
          %s231 = sand.u32 %s45, 1
          %s232 = scalar_lea.sflag [#allocation5], %s231
          %s233 = sand.u32 %s45, 1
          %s234 = smul.addr %s233, 8
          %s235 = scalar_lea.vmem [#allocation4], %s234
          %s236 = sadd.s32 %s28, %s29
          %238 = vsyncadd %s232, 0
          %s239 = smul.addr %s236, 8
          %s240 = scalar_lea.hbm %s0, %s239
          %s242 = sshll.u32 %s240, 4
          %s243 = int_to_ptr.hbm [resolvable:$true] %s242
          %s244 = sshll.u32 %s235, 4
          %s245 = int_to_ptr.vmem [resolvable:$true] %s244
          %247 = dma.hbm_to_vmem [thread:$0]  %s243, 128, %s245, %s232
        $region28: #{tpu_custom_call.1} parent=23 // pred_fallthru
          _
        // Predicated region
        $region29: #{tpu_custom_call.1} parent=23 // pred_check
          %p248 = pneg %p83
        $region30: #{tpu_custom_call.1} parent=23 // pred_check_branch
          %250 = sbr.rel (%p248) target = $region32
        $region31: #{tpu_custom_call.1} parent=23 // pred_region
          %s251 = sand.u32 %s21, 1
          %s252 = scalar_lea.sflag [#allocation8], %s251
          %s253 = sand.u32 %s73, 1
          %s254 = smul.addr %s253, 8
          %s255 = scalar_lea.vmem [#allocation7], %s254
          %s256 = sadd.s32 %s28, %s29
          %258 = vsyncadd %s252, 0
          %s259 = smul.addr %s256, 8
          %s260 = scalar_lea.hbm %s1, %s259
          %s262 = sshll.u32 %s260, 4
          %s263 = int_to_ptr.hbm [resolvable:$true] %s262
          %s264 = sshll.u32 %s255, 4
          %s265 = int_to_ptr.vmem [resolvable:$true] %s264
          %267 = dma.hbm_to_vmem [thread:$0]  %s263, 128, %s265, %s252
        $region32: #{tpu_custom_call.1} parent=23 // pred_fallthru
          _
        // Predicated region
        $region33: #{tpu_custom_call.1} parent=23 // pred_check
          %p268 = pneg %p111
        $region34: #{tpu_custom_call.1} parent=23 // pred_check_branch
          %270 = sbr.rel (%p268) target = $region36
        $region35: #{tpu_custom_call.1} parent=23 // pred_region
          %s271 = sand.u32 %s21, 1
          %s272 = scalar_lea.sflag [#allocation8], %s271
          %s273 = sand.u32 %s101, 1
          %s274 = smul.addr %s273, 8
          %s275 = scalar_lea.vmem [#allocation9], %s274
          %s276 = sadd.s32 %s28, %s29
          %278 = vsyncadd %s272, 0
          %s279 = smul.addr %s276, 8
          %s280 = scalar_lea.hbm %s2, %s279
          %s282 = sshll.u32 %s280, 4
          %s283 = int_to_ptr.hbm [resolvable:$true] %s282
          %s284 = sshll.u32 %s275, 4
          %s285 = int_to_ptr.vmem [resolvable:$true] %s284
          %287 = dma.hbm_to_vmem [thread:$0]  %s283, 128, %s285, %s272
        $region36: #{tpu_custom_call.1} parent=23 // pred_fallthru
          _
      $region24: #{tpu_custom_call.1} parent=5 // pred_fallthru
        _
      %p288 = scmp.le.s32.totalorder 1, %s21
      %p289 = scmp.lt.s32.totalorder %s21, 3
      %p290 = pnand %p288, %p289
      %p291 = pneg %p290
      // Predicated region
      $region37: #{tpu_custom_call.1} parent=5 // pred_check
        _
      $region38: #{tpu_custom_call.1} parent=5 // pred_check_branch
        %293 = sbr.rel (%p290) target = $region40
      $region39: #{tpu_custom_call.1} parent=5 // pred_region
        %s294 = ssub.s32 %s21, 1
        %s295 = sand.u32 %s48, 1
        %s296 = scalar_lea.sflag [#allocation5], %s295
        %s297 = sand.u32 %s48, 1
        %s298 = smul.addr %s297, 8
        %s299 = scalar_lea.vmem [#allocation4], %s298
        // Predicated region
        $region41: #{tpu_custom_call.1} parent=39 // pred_check
          %p300 = pneg %p61
        $region42: #{tpu_custom_call.1} parent=39 // pred_check_branch
          %302 = sbr.rel (%p300) target = $region44
        $region43: #{tpu_custom_call.1} parent=39 // pred_region
          %304 = dma.done %s296, 128
        $region44: #{tpu_custom_call.1} parent=39 // pred_fallthru
          _
        %s305 = sand.u32 %s26, 1
        %s306 = scalar_lea.sflag [#allocation8], %s305
        %s307 = sand.u32 %s76, 1
        %s308 = smul.addr %s307, 8
        %s309 = scalar_lea.vmem [#allocation7], %s308
        // Predicated region
        $region45: #{tpu_custom_call.1} parent=39 // pred_check
          %p310 = pneg %p89
        $region46: #{tpu_custom_call.1} parent=39 // pred_check_branch
          %312 = sbr.rel (%p310) target = $region48
        $region47: #{tpu_custom_call.1} parent=39 // pred_region
          %314 = dma.done %s306, 128
        $region48: #{tpu_custom_call.1} parent=39 // pred_fallthru
          _
        %s315 = sand.u32 %s26, 1
        %s316 = scalar_lea.sflag [#allocation8], %s315
        %s317 = sand.u32 %s104, 1
        %s318 = smul.addr %s317, 8
        %s319 = scalar_lea.vmem [#allocation9], %s318
        // Predicated region
        $region49: #{tpu_custom_call.1} parent=39 // pred_check
          %p320 = pneg %p117
        $region50: #{tpu_custom_call.1} parent=39 // pred_check_branch
          %322 = sbr.rel (%p320) target = $region52
        $region51: #{tpu_custom_call.1} parent=39 // pred_region
          %324 = dma.done %s316, 128
        $region52: #{tpu_custom_call.1} parent=39 // pred_fallthru
          _
        // Predicated region
        $region53: #{tpu_custom_call.1} parent=39 // pred_check
          %p325 = pneg %p138
        $region54: #{tpu_custom_call.1} parent=39 // pred_check_branch
          %327 = sbr.rel (%p325) target = $region56
        $region55: #{tpu_custom_call.1} parent=39 // pred_region
          %329 = dma.done [#allocation11], 128
        $region56: #{tpu_custom_call.1} parent=39 // pred_fallthru
          _
        // Predicated region
        $region57: #{tpu_custom_call.1} parent=39 // pred_check
          %p330 = pneg %p159
        $region58: #{tpu_custom_call.1} parent=39 // pred_check_branch
          %332 = sbr.rel (%p330) target = $region60
        $region59: #{tpu_custom_call.1} parent=39 // pred_region
          %334 = dma.done [#allocation11], 128
        $region60: #{tpu_custom_call.1} parent=39 // pred_fallthru
          _
        %s335 = sand.u32 %s48, 1
        %s336 = scalar_lea.sflag [#allocation5], %s335
        %s337 = sand.u32 %s48, 1
        %s338 = smul.addr %s337, 8
        %s339 = scalar_lea.vmem [#allocation4], %s338
        %p340 = pneg %p61
        %p341 = pneg %p58
        %s342 = sand.u32 %s26, 1
        %s343 = scalar_lea.sflag [#allocation8], %s342
        %s344 = sand.u32 %s76, 1
        %s345 = smul.addr %s344, 8
        %s346 = scalar_lea.vmem [#allocation7], %s345
        %p347 = pneg %p89
        %p348 = pneg %p86
        %s349 = sand.u32 %s26, 1
        %s350 = scalar_lea.sflag [#allocation8], %s349
        %s351 = sand.u32 %s104, 1
        %s352 = smul.addr %s351, 8
        %s353 = scalar_lea.vmem [#allocation9], %s352
        %p354 = pneg %p117
        %p355 = pneg %p114
        %p356 = pneg %p138
        %p357 = pneg %p135
        %p358 = pneg %p159
        %p359 = pneg %p156
        %p360 = pneg %p185
        %p361 = pneg %p182
        %s362 = sand.u32 %s172, 1
        %s363 = scalar_lea.sflag [#allocation6], %s362
        %s364 = sand.u32 %s172, 1
        %s365 = smul.addr %s364, 8
        %s366 = scalar_lea.vmem [#allocation13], %s365
        %s367 = sadd.s32 %s30, %s31
        %s368 = sadd.s32 %s30, %s31
        %s369 = sadd.s32 %s30, %s31
        %p370 = scmp.eq.s32.totalorder %s31, 0
        // Predicated region
        $region61: #{tpu_custom_call.1} parent=39 // pred_check
          %p371 = pneg %p370
        $region62: #{tpu_custom_call.1} parent=39 // pred_check_branch
          %373 = sbr.rel (%p371) target = $region64
        $region63: #{tpu_custom_call.1} parent=39 // pred_region
          %374 = vst [vmem:[#allocation2] sm:$0xff] 0.0
          %s375 = scalar_lea.smem [#allocation3], 0
          %376 = sst [smem:[%s375]] 0.0
        $region64: #{tpu_custom_call.1} parent=39 // pred_fallthru
          _
        %p377 = scmp.eq.s32.totalorder %s30, 0
        %p378 = pnand %p377, %p370
        %p379 = pneg %p378
        // Predicated region
        $region65: #{tpu_custom_call.1} parent=39 // pred_check
          _
        $region66: #{tpu_custom_call.1} parent=39 // pred_check_branch
          %381 = sbr.rel (%p378) target = $region68
        $region67: #{tpu_custom_call.1} parent=39 // pred_region
          %v382 = vld [vmem:[#allocation10] sm:$0xff]
          %v383 = vld [vmem:[#allocation12] sm:$0xff]
          %v384 = vmax.f32 %v382, 0.0
          %v385 = vmul.f32 %v382, %v383
          %v386 = vsub.f32 %v384, %v385
          %v387 = vand.u32 2147483647, %v382
          %v388 = vsub.f32 0.0, %v387
          %v389 = vmul.f32 %v388, 1.442695
          %v390 = vpow.pop %v389
          %v391 = vadd.f32 %v390, 1.0
          %v392 = vlog2.pop %v391
          %v393 = vmul.f32 %v392, 0.6931472
          %v394 = vmul.f32 -0.5, %v390
          %v395 = vadd.f32 %v394, 1.0
          %v396 = vmul.f32 %v395, %v390
          %v397 = vand.u32 2147483647, %v390
          %vm398 = vcmp.lt.f32.partialorder %v397, 0.0004427343
          %v399 = vsel %vm398, %v396, %v393
          %v400 = vadd.f32 %v386, %v399
          %v401 = vlaneseq
          %v402 = vshrl.u32 %v401, 7
          %v403 = vmul.u32 %v402, 128
          %v404 = vlaneseq
          %v405 = vand.u32 %v404, 127
          %v406 = vadd.s32 %v403, %v405
          %vm407 = vcmp.lt.s32.totalorder %v406, 16
          %v408 = vsel %vm407, %v400, 0.0
          %409 = vadd.xlane.f32.xlu0 %v408
          %v410 = vpop.xlane.xlu0 %409
          %v411 = vrot.slane %v410, 4
          %v412 = vadd.f32 %v410, %v411
          %v413 = vrot.slane %v412, 2
          %v414 = vadd.f32 %v412, %v413
          %v415 = vrot.slane %v414, 1
          %v416 = vadd.f32 %v414, %v415
          %s417 = vtos %v416
          %s418 = scalar_lea.smem [#allocation3], 0
          %419 = sst [smem:[%s418]] %s417
        $region68: #{tpu_custom_call.1} parent=39 // pred_fallthru
          _
        %v420 = vld [vmem:[%s319] sm:$0xff]
        %v421 = vld [vmem:[%s309] sm:$0xff]
        %v422 = vsub.f32 %v421, %v420
        %v423 = vld [vmem:[%s299] sm:$0xff]
        %v424 = vsub.f32 %v423, %v420
        %v425 = vld [vmem:[#allocation2] sm:$0xff]
        %v426 = vmul.f32 %v422, %v422
        %v427 = vmul.f32 %v424, %v424
        %v428 = vadd.f32 %v426, %v427
        %v429 = vadd.f32 %v425, %v428
        %430 = vst [vmem:[#allocation2] sm:$0xff] %v429
        // Predicated region
        $region69: #{tpu_custom_call.1} parent=39 // pred_check
          %p431 = pneg %p370
        $region70: #{tpu_custom_call.1} parent=39 // pred_check_branch
          %433 = sbr.rel (%p431) target = $region72
        $region71: #{tpu_custom_call.1} parent=39 // pred_region
          %v434 = vld [vmem:[#allocation2] sm:$0xff]
          %435 = vadd.xlane.f32.xlu0 %v434
          %v436 = vpop.xlane.xlu0 %435
          %v437 = vrot.slane %v436, 4
          %v438 = vadd.f32 %v436, %v437
          %v439 = vrot.slane %v438, 2
          %v440 = vadd.f32 %v438, %v439
          %v441 = vrot.slane %v440, 1
          %v442 = vadd.f32 %v440, %v441
          %s443 = vtos %v442
          %s444 = smul.f32 %s443, 0.001953125
          %s445 = sld [smem:[#allocation3]]
          %s446 = smul.f32 %s445, 0.0625
          %s447 = scalar_select %p377, %s446, 0.0
          %s448 = sadd.f32 %s444, %s447
          %v449 = vlaneseq
          %v450 = vshrl.u32 %v449, 7
          %v451 = vlaneseq
          %v452 = vand.u32 %v451, 127
          %vm453 = vcmp.eq.s32.totalorder %v450, 0
          %vm454 = vcmp.eq.s32.totalorder %v452, 0
          %vm455 = vmand %vm453, %vm454
          %v456 = vstv %s448
          %v457 = vsel %vm455, %v456, 0.0
          %458 = vst [vmem:[%s366] sm:$0xff] %v457
        $region72: #{tpu_custom_call.1} parent=39 // pred_fallthru
          _
        %s459 = sand.u32 %s172, 1
        %s460 = scalar_lea.sflag [#allocation6], %s459
        %s461 = sand.u32 %s172, 1
        %s462 = smul.addr %s461, 8
        %s463 = scalar_lea.vmem [#allocation13], %s462
        // Predicated region
        $region73: #{tpu_custom_call.1} parent=39 // pred_check
          %p464 = pneg %p182
        $region74: #{tpu_custom_call.1} parent=39 // pred_check_branch
          %466 = sbr.rel (%p464) target = $region76
        $region75: #{tpu_custom_call.1} parent=39 // pred_region
          %468 = vsyncadd %s460, 0
          %s469 = smul.addr %s30, 8
          %s470 = scalar_lea.hbm %s5, %s469
          %s472 = sshll.u32 %s463, 4
          %s473 = int_to_ptr.vmem [resolvable:$true] %s472
          %s474 = sshll.u32 %s470, 4
          %s475 = int_to_ptr.hbm [resolvable:$true] %s474
          %477 = dma.vmem_to_hbm [thread:$0]  %s473, 128, %s475, %s460
        $region76: #{tpu_custom_call.1} parent=39 // pred_fallthru
          _
      $region40: #{tpu_custom_call.1} parent=5 // pred_fallthru
        _
      %p478 = scmp.le.s32.totalorder 2, %s21
      // Predicated region
      $region77: #{tpu_custom_call.1} parent=5 // pred_check
        %p479 = pneg %p478
      $region78: #{tpu_custom_call.1} parent=5 // pred_check_branch
        %481 = sbr.rel (%p479) target = $region80
      $region79: #{tpu_custom_call.1} parent=5 // pred_region
        %s482 = ssub.s32 %s21, 2
        // Predicated region
        $region81: #{tpu_custom_call.1} parent=79 // pred_check
          %p483 = pneg %p188
        $region82: #{tpu_custom_call.1} parent=79 // pred_check_branch
          %485 = sbr.rel (%p483) target = $region84
        $region83: #{tpu_custom_call.1} parent=79 // pred_region
          %s486 = sand.u32 %s173, 1
          %s487 = scalar_lea.sflag [#allocation6], %s486
          %s488 = sand.u32 %s173, 1
          %s489 = smul.addr %s488, 8
          %s490 = scalar_lea.vmem [#allocation13], %s489
          %492 = dma.done %s487, 128
        $region84: #{tpu_custom_call.1} parent=79 // pred_fallthru
          _
      $region80: #{tpu_custom_call.1} parent=5 // pred_fallthru
        _
    $region6: #{tpu_custom_call.1} parent=1 // loop_footer
      %s25 = sadd.s32 1, %s21
    $region7: #{tpu_custom_call.1} parent=1 // loop_footer_branch
      %20 = sbr.rel target = $region3
    $region8: #{tpu_custom_call.1} parent=1 // loop_exit
      _
    %493 = vsyncpa [#allocation5], 1
    %s494 = scalar_lea.sflag [#allocation5], 1
    %495 = vsyncpa %s494, 1
    %496 = vsyncpa [#allocation8], 1
    %s497 = scalar_lea.sflag [#allocation8], 1
    %498 = vsyncpa %s497, 1
    %499 = vsyncpa [#allocation11], 1
    %500 = vsyncpa [#allocation6], 1
    %s501 = scalar_lea.sflag [#allocation6], 1
    %502 = vsyncpa %s501, 1

</llo_original>
